<compile_context>
chip_gen: v7x
topology: tpu7x:2x2x1
jax: 0.10.0
libtpu: 0.0.40
codegen_flags: <defaults>
</compile_context>

<pallas_src>
import functools

import jax
import jax.numpy as jnp
from jax import lax
from jax.experimental import pallas as pl
from jax.experimental.pallas import tpu as pltpu


# ---------------------------------------------------------------------------
# Kernel
# ---------------------------------------------------------------------------
def _mlp_kernel(n_layers, *refs):
    """refs = (x_ref, w0_ref, b0_ref, w1_ref, b1_ref, ..., out_ref).

    x_ref   : (batch_tile, F) tile of x in its native dtype.
    w_i     : native PyTorch (out, in) layout, compute dtype (bf16/f32).
    b_i     : (out, 1) f32 (lane broadcast).
    out_ref : (1, batch_tile) f32 — lane-dense output.
    """
    x_ref = refs[0]
    o_ref = refs[-1]
    w0_ref = refs[1]
    b0_ref = refs[2]

    # Cast once in-kernel (no wrapper-side cast/transpose/pad pass over x).
    x = x_ref[...].astype(w0_ref.dtype)

    # Layer 0: contract over F with batch staying on lanes:
    #   (H1, F) x (batch_tile, F) --contract F--> (H1, batch_tile)   ("NT")
    h = lax.dot_general(w0_ref[...], x, (((1,), (1,)), ((), ())),
                        preferred_element_type=jnp.float32)
    h = h + b0_ref[...]                       # f32 bias add (lane broadcast)
    if n_layers > 1:
        h = jnp.maximum(h, 0.1 * h)           # LeakyReLU(0.1): one vmax/vreg

    # Remaining layers: plain NN matmuls, activations stay (features, batch).
    for li in range(1, n_layers):
        w_ref = refs[1 + 2 * li]
        b_ref = refs[2 + 2 * li]
        h = jnp.dot(w_ref[...], h.astype(w_ref.dtype),
                    preferred_element_type=jnp.float32)
        h = h + b_ref[...]
        if li < n_layers - 1:
            h = jnp.maximum(h, 0.1 * h)

    o_ref[...] = h.astype(o_ref.dtype)


# ---------------------------------------------------------------------------
# Tiling helpers
# ---------------------------------------------------------------------------
def _cdiv(a, b):
    return -(-a // b)


def _round_up(x, m):
    return ((x + m - 1) // m) * m


def _batch_tile_cap():
    """Lane-tile cap, gated on physical VMEM (v7x: 64 MiB -> smaller cap)."""
    try:
        vmem = int(pltpu.get_tpu_info().vmem_capacity_bytes)
    except Exception:
        vmem = 64 * 2**20  # conservative (v7x-sized)
    return 8192 if vmem >= 100 * 2**20 else 4096


def _choose_batch_tile(batch, cap):
    """Multiple-of-128 lane tile; targets an even number of grid steps so
    v7x's two TensorCores split the 'parallel' batch axis evenly."""
    b128 = _round_up(max(batch, 1), 128)
    if b128 <= 128:
        return 128
    nsteps = max(2, 2 * _cdiv(b128, 2 * cap))
    return min(cap, _round_up(_cdiv(b128, nsteps), 128))


# ---------------------------------------------------------------------------
# Wrapper
# ---------------------------------------------------------------------------
def failure_network_forward(x, params, *, batch_tile=None,
                            compute_dtype=jnp.bfloat16,
                            min_pallas_batch=512):
    """Fused-MLP forward equivalent to FailureNetwork.forward.

    Args:
      x: (B, input_size) input (PyTorch convention). f32 or bf16.
      params: list of (W, b) in native PyTorch layout: W (out, in), b (out,).
      batch_tile: batch lanes per grid step (multiple of 128). None = auto.
      compute_dtype: matmul-operand dtype (bf16 = MXU fast path, f32 = exact).
      min_pallas_batch: below this batch size use the pure-JAX fast path
        (the Pallas launch/DMA overhead dominates tiny batches).
    Returns:
      (B, 1) float32 predicted failure rate.
    """
    B, F = x.shape
    n_layers = len(params)

    # Tiny-batch fast path: XLA's fused dot chain beats a padded Pallas launch.
    if batch_tile is None and B < min_pallas_batch:
        return reference_forward(x, params, compute_dtype)

    if batch_tile is None:
        batch_tile = _choose_batch_tile(B, _batch_tile_cap())
    assert batch_tile % 128 == 0, "batch_tile must be a multiple of 128 (lanes)"

    grid = (_cdiv(B, batch_tile),)   # ragged last block; no explicit padding

    flat_args = [x]
    in_specs = [pl.BlockSpec((batch_tile, F), lambda i: (i, 0))]
    param_bytes = 0
    for w, b in params:
        w_c = w.astype(compute_dtype)
        b_c = b.reshape(-1, 1).astype(jnp.float32)
        flat_args.extend([w_c, b_c])
        # Whole-array, grid-invariant blocks: weights/biases stay VMEM-resident.
        in_specs.append(pl.BlockSpec(w_c.shape, lambda i: (0, 0)))
        in_specs.append(pl.BlockSpec(b_c.shape, lambda i: (0, 0)))
        param_bytes += int(w_c.size) * w_c.dtype.itemsize + int(b_c.size) * 4

    out_dim = params[-1][0].shape[0]  # == 1
    out_spec = pl.BlockSpec((out_dim, batch_tile), lambda i: (0, i))

    # Advisory cost estimate so XLA schedules surrounding ops sensibly.
    flops = 2 * B * sum(int(w.shape[0]) * int(w.shape[1]) for w, _ in params)
    bytes_accessed = (int(x.size) * x.dtype.itemsize + param_bytes
                      + B * out_dim * 4)
    cost = pl.CostEstimate(flops=int(flops), transcendentals=0,
                           bytes_accessed=int(bytes_accessed))

    # Explicit scoped-VMEM budget: 2x-buffered input/output blocks, resident
    # params, f32 intermediates; clamp to [32 MiB, 64 MiB] (v7x-physical safe).
    max_w = max([F] + [int(w.shape[0]) for w, _ in params])
    vmem_est = (2 * batch_tile * F * x.dtype.itemsize
                + 2 * param_bytes
                + 2 * batch_tile * out_dim * 4
                + 3 * max_w * batch_tile * 4)
    vmem_limit = int(min(64 * 2**20, max(32 * 2**20, 2 * vmem_est)))

    out_t = pl.pallas_call(
        functools.partial(_mlp_kernel, n_layers),
        out_shape=jax.ShapeDtypeStruct((out_dim, B), jnp.float32),
        grid_spec=pltpu.PrefetchScalarGridSpec(
            num_scalar_prefetch=0,
            grid=grid,
            in_specs=in_specs,
            out_specs=out_spec,
        ),
        compiler_params=pltpu.CompilerParams(
            dimension_semantics=("parallel",),
            vmem_limit_bytes=vmem_limit,
        ),
        cost_estimate=cost,
    )(*flat_args)

    # Back to the PyTorch (B, 1) convention (tiny 4 B/elem transpose).
    return out_t.T


# ---------------------------------------------------------------------------
# Reference & init
# ---------------------------------------------------------------------------
def init_params(key, input_size, hidden_sizes):
    """Deterministic init; weights in native PyTorch (out, in) layout."""
    sizes = [input_size] + list(hidden_sizes) + [1]
    params = []
    for i in range(len(sizes) - 1):
        key, kw, kb = jax.random.split(key, 3)
        fan_in, fan_out = sizes[i], sizes[i + 1]
        scale = 1.0 / jnp.sqrt(jnp.float32(fan_in))
        w = jax.random.uniform(kw, (fan_out, fan_in), jnp.float32, -scale, scale)
        b = jax.random.uniform(kb, (fan_out,), jnp.float32, -scale, scale)
        params.append((w, b))
    return params


def reference_forward(x, params, compute_dtype=jnp.float32):
    """Pure-JAX reference matching PyTorch FailureNetwork.forward semantics,
    with the same operand-dtype casts as the kernel path."""
    h = x.astype(jnp.float32)
    n = len(params)
    for li, (w, b) in enumerate(params):
        h = jnp.dot(h.astype(compute_dtype), w.astype(compute_dtype).T,
                    preferred_element_type=jnp.float32)
        h = h + b.astype(jnp.float32)
        if li < n - 1:
            h = jnp.maximum(h, 0.1 * h)
    return h


# ---------------------------------------------------------------------------
# Self-test
# ---------------------------------------------------------------------------
if __name__ == "__main__":
    key = jax.random.PRNGKey(0)
    k_x, k_x2, k_p = jax.random.split(key, 3)

    input_size = 16
    hidden_sizes = [32, 32]
    params = init_params(k_p, input_size, hidden_sizes)

    # --- Small shapes consistent with the module (B=8, F=16). Force the
    # Pallas path (min_pallas_batch=0) to exercise the kernel itself. ---
    B = 8
    x = jax.random.normal(k_x, (B, input_size), jnp.float32)

    out_f32 = jax.block_until_ready(
        failure_network_forward(x, params, compute_dtype=jnp.float32,
                                min_pallas_batch=0))
    ref_f32 = reference_forward(x, params, jnp.float32)
    assert out_f32.shape == (B, 1), out_f32.shape
    assert jnp.allclose(out_f32, ref_f32, atol=1e-5, rtol=1e-5), (
        f"f32 max abs err {jnp.max(jnp.abs(out_f32 - ref_f32))}")

    out_bf16 = jax.block_until_ready(
        failure_network_forward(x, params, min_pallas_batch=0))
    ref_bf16 = reference_forward(x, params, jnp.bfloat16)
    assert out_bf16.shape == (B, 1), out_bf16.shape
    assert jnp.allclose(out_bf16, ref_bf16, atol=2e-3, rtol=2e-3), (
        f"bf16 max abs err {jnp.max(jnp.abs(out_bf16 - ref_bf16))}")

    # Default tiny-batch fast path (pure-JAX) still returns the right shape.
    out_fast = jax.block_until_ready(failure_network_forward(x, params))
    assert out_fast.shape == (B, 1)

    # --- Slightly larger batch to exercise the multi-step grid (even grid for
    # v7x) and the ragged last block (640 = 2 steps of 384, last one partial).
    B2 = 640
    x2 = jax.random.normal(k_x2, (B2, input_size), jnp.float32)
    out2 = jax.block_until_ready(
        failure_network_forward(x2, params, compute_dtype=jnp.float32,
                                min_pallas_batch=0))
    ref2 = reference_forward(x2, params, jnp.float32)
    assert out2.shape == (B2, 1), out2.shape
    assert jnp.allclose(out2, ref2, atol=1e-5, rtol=1e-5), (
        f"ragged-grid max abs err {jnp.max(jnp.abs(out2 - ref2))}")

    print("KERNEL_OK")
</pallas_src>

<mosaic_0001>
module attributes {stable_mosaic.version = 11 : i64} {
  func.func @_mlp_kernel(%arg0: i32, %arg1: memref<128x16xf32, #tpu.memory_space<vmem>>, %arg2: memref<32x16xf32, #tpu.memory_space<vmem>>, %arg3: memref<32x1xf32, #tpu.memory_space<vmem>>, %arg4: memref<32x32xf32, #tpu.memory_space<vmem>>, %arg5: memref<32x1xf32, #tpu.memory_space<vmem>>, %arg6: memref<1x32xf32, #tpu.memory_space<vmem>>, %arg7: memref<1x1xf32, #tpu.memory_space<vmem>>, %arg8: memref<1x128xf32, #tpu.memory_space<vmem>>) attributes {dimension_semantics = [#tpu.dimension_semantics<parallel>], iteration_bounds = array<i64: 1>, scalar_prefetch = 0 : i64, scratch_operands = 0 : i64, tpu.core_type = #tpu.core_type<tc>, window_params = [{transform_indices = @transform_0, window_bounds = array<i64: 128, 16>}, {pipeline_mode = #tpu.pipeline_mode<synchronous>, transform_indices = @transform_1, window_bounds = array<i64: 32, 16>}, {pipeline_mode = #tpu.pipeline_mode<synchronous>, transform_indices = @transform_2, window_bounds = array<i64: 32, 1>}, {pipeline_mode = #tpu.pipeline_mode<synchronous>, transform_indices = @transform_3, window_bounds = array<i64: 32, 32>}, {pipeline_mode = #tpu.pipeline_mode<synchronous>, transform_indices = @transform_4, window_bounds = array<i64: 32, 1>}, {pipeline_mode = #tpu.pipeline_mode<synchronous>, transform_indices = @transform_5, window_bounds = array<i64: 1, 32>}, {pipeline_mode = #tpu.pipeline_mode<synchronous>, transform_indices = @transform_6, window_bounds = array<i64: 1, 1>}, {transform_indices = @transform_7, window_bounds = array<i64: 1, 128>}]} {
    %c0 = arith.constant 0 : index
    %c0_0 = arith.constant 0 : index
    %0 = vector.load %arg1[%c0, %c0_0] : memref<128x16xf32, #tpu.memory_space<vmem>>, vector<128x16xf32>
    %c0_1 = arith.constant 0 : index
    %c0_2 = arith.constant 0 : index
    %1 = vector.load %arg2[%c0_1, %c0_2] : memref<32x16xf32, #tpu.memory_space<vmem>>, vector<32x16xf32>
    %cst = arith.constant dense<0.000000e+00> : vector<32x128xf32>
    %2 = tpu.matmul %1, %0, %cst {dimension_numbers = #tpu.dot_dimension_numbers<[1], [1], [0], [0], [0, 0, 1, 0], [], []>} : vector<32x16xf32>, vector<128x16xf32>, vector<32x128xf32> -> vector<32x128xf32>
    %c0_3 = arith.constant 0 : index
    %c0_4 = arith.constant 0 : index
    %3 = vector.load %arg3[%c0_3, %c0_4] : memref<32x1xf32, #tpu.memory_space<vmem>>, vector<32x1xf32>
    %4 = vector.broadcast %3 : vector<32x1xf32> to vector<32x128xf32>
    %5 = arith.addf %2, %4 : vector<32x128xf32>
    %cst_5 = arith.constant 1.000000e-01 : f32
    %6 = vector.broadcast %cst_5 : f32 to vector<32x128xf32>
    %7 = arith.mulf %6, %5 : vector<32x128xf32>
    %8 = arith.maximumf %5, %7 : vector<32x128xf32>
    %c0_6 = arith.constant 0 : index
    %c0_7 = arith.constant 0 : index
    %9 = vector.load %arg4[%c0_6, %c0_7] : memref<32x32xf32, #tpu.memory_space<vmem>>, vector<32x32xf32>
    %cst_8 = arith.constant dense<0.000000e+00> : vector<32x128xf32>
    %10 = tpu.matmul %9, %8, %cst_8 {dimension_numbers = #tpu.dot_dimension_numbers<[1], [0], [0], [1], [0, 0, 1, 1], [], []>} : vector<32x32xf32>, vector<32x128xf32>, vector<32x128xf32> -> vector<32x128xf32>
    %c0_9 = arith.constant 0 : index
    %c0_10 = arith.constant 0 : index
    %11 = vector.load %arg5[%c0_9, %c0_10] : memref<32x1xf32, #tpu.memory_space<vmem>>, vector<32x1xf32>
    %12 = vector.broadcast %11 : vector<32x1xf32> to vector<32x128xf32>
    %13 = arith.addf %10, %12 : vector<32x128xf32>
    %cst_11 = arith.constant 1.000000e-01 : f32
    %14 = vector.broadcast %cst_11 : f32 to vector<32x128xf32>
    %15 = arith.mulf %14, %13 : vector<32x128xf32>
    %16 = arith.maximumf %13, %15 : vector<32x128xf32>
    %c0_12 = arith.constant 0 : index
    %c0_13 = arith.constant 0 : index
    %17 = vector.load %arg6[%c0_12, %c0_13] : memref<1x32xf32, #tpu.memory_space<vmem>>, vector<1x32xf32>
    %cst_14 = arith.constant dense<0.000000e+00> : vector<1x128xf32>
    %18 = tpu.matmul %17, %16, %cst_14 {dimension_numbers = #tpu.dot_dimension_numbers<[1], [0], [0], [1], [0, 0, 1, 1], [], []>} : vector<1x32xf32>, vector<32x128xf32>, vector<1x128xf32> -> vector<1x128xf32>
    %c0_15 = arith.constant 0 : index
    %c0_16 = arith.constant 0 : index
    %19 = vector.load %arg7[%c0_15, %c0_16] : memref<1x1xf32, #tpu.memory_space<vmem>>, vector<1x1xf32>
    %20 = vector.broadcast %19 : vector<1x1xf32> to vector<1x128xf32>
    %21 = arith.addf %18, %20 : vector<1x128xf32>
    %c0_17 = arith.constant 0 : index
    %c0_18 = arith.constant 0 : index
    %22 = vector.load %arg8[%c0_17, %c0_18] : memref<1x128xf32, #tpu.memory_space<vmem>>, vector<1x128xf32>
    tpu.vector_store %arg8[%c0_17, %c0_18], %21 {strides = array<i32>} : memref<1x128xf32, #tpu.memory_space<vmem>>, vector<1x128xf32>,
    return
  }
  func.func @transform_0(%arg0: i32) -> (i32, i32) {
    %c0_i32 = arith.constant 0 : i32
    %c0_i32_0 = arith.constant 0 : i32
    return %arg0, %c0_i32 : i32, i32
  }
  func.func @transform_1(%arg0: i32) -> (i32, i32) {
    %c0_i32 = arith.constant 0 : i32
    %c0_i32_0 = arith.constant 0 : i32
    %c0_i32_1 = arith.constant 0 : i32
    return %c0_i32, %c0_i32_0 : i32, i32
  }
  func.func @transform_2(%arg0: i32) -> (i32, i32) {
    %c0_i32 = arith.constant 0 : i32
    %c0_i32_0 = arith.constant 0 : i32
    %c0_i32_1 = arith.constant 0 : i32
    return %c0_i32, %c0_i32_0 : i32, i32
  }
  func.func @transform_3(%arg0: i32) -> (i32, i32) {
    %c0_i32 = arith.constant 0 : i32
    %c0_i32_0 = arith.constant 0 : i32
    %c0_i32_1 = arith.constant 0 : i32
    return %c0_i32, %c0_i32_0 : i32, i32
  }
  func.func @transform_4(%arg0: i32) -> (i32, i32) {
    %c0_i32 = arith.constant 0 : i32
    %c0_i32_0 = arith.constant 0 : i32
    %c0_i32_1 = arith.constant 0 : i32
    return %c0_i32, %c0_i32_0 : i32, i32
  }
  func.func @transform_5(%arg0: i32) -> (i32, i32) {
    %c0_i32 = arith.constant 0 : i32
    %c0_i32_0 = arith.constant 0 : i32
    %c0_i32_1 = arith.constant 0 : i32
    return %c0_i32, %c0_i32_0 : i32, i32
  }
  func.func @transform_6(%arg0: i32) -> (i32, i32) {
    %c0_i32 = arith.constant 0 : i32
    %c0_i32_0 = arith.constant 0 : i32
    %c0_i32_1 = arith.constant 0 : i32
    return %c0_i32, %c0_i32_0 : i32, i32
  }
  func.func @transform_7(%arg0: i32) -> (i32, i32) {
    %c0_i32 = arith.constant 0 : i32
    %c0_i32_0 = arith.constant 0 : i32
    return %c0_i32, %arg0 : i32, i32
  }
}

</mosaic_0001>

<llo_original>
// kernel: tpu_custom_call.1
$region0: #{tpu_custom_call.1}
  #allocation0 [shape = 'u32[]', space=smem, size = 0x4, offset = 0x4, fixed_abs, tag = 'smem constant byte address 0x4 - core index']
  #allocation1 [shape = 'u32[144,128]{1,0:T(1,128)}', space=vmem, size = 0x12000, scoped, tag = 'internal scratch']
  #allocation2 [shape = 'f32[1,1]{1,0:T(1,128)S(1)}', space=vmem, size = 0x200, scoped, tag = 'scoped memory for tpu_custom_call.1']
  %s0 = inlined_call_operand.vmem [shape: f32[8,16], index: 0, kind: input, shape index: {}]
  %s1 = inlined_call_operand.vmem [shape: f32[32,16], index: 1, kind: input, shape index: {}]
  %s2 = inlined_call_operand.vmem [shape: f32[32,1], index: 2, kind: input, shape index: {}]
  %s3 = inlined_call_operand.vmem [shape: f32[32,32], index: 3, kind: input, shape index: {}]
  %s4 = inlined_call_operand.vmem [shape: f32[32,1], index: 4, kind: input, shape index: {}]
  %s5 = inlined_call_operand.vmem [shape: f32[1,32], index: 5, kind: input, shape index: {}]
  %s6 = inlined_call_operand.<no memory space> [shape: f32[1,1], index: 6, kind: input, shape index: {}]
  %s7 = inlined_call_operand.hbm [shape: f32[1,8], index: 7, kind: output, shape index: {}]
  %s8 = sld [smem:[#allocation0]]
  $region38: #{tpu_custom_call.1} parent=0
    _
  %s10 = ssub.s32 1, %s8
  %s11 = scalar_select 0, %s10, %s8
  %v12 = vstv %s6
  %13 = vst [vmem:[#allocation2] sm:$0x1] %v12
  $region1: #{tpu_custom_call.1} parent=0
    #allocation3 [shape = 'u8[512]{0}', space=vmem, size = 0x400, scoped, tag = 'output window, operand 0, single buffered']
    #allocation4 [shape = 's32[1]{0}', space=sflag, size = 0x4, scoped, tag = 'scoped memory for tpu_custom_call.1']
    %14 = vsyncpa [#allocation4], 0
    // Predicated region
    $region2: #{tpu_custom_call.1} parent=1 // pred_check
      _
    $region3: #{tpu_custom_call.1} parent=1 // pred_check_branch
      %16 = sbr.rel (0) target = $region5
    $region4: #{tpu_custom_call.1} parent=1 // pred_region
      _
    $region5: #{tpu_custom_call.1} parent=1 // pred_fallthru
      _
    // Predicated region
    $region6: #{tpu_custom_call.1} parent=1 // pred_check
      _
    $region7: #{tpu_custom_call.1} parent=1 // pred_check_branch
      %18 = sbr.rel (0) target = $region9
    $region8: #{tpu_custom_call.1} parent=1 // pred_region
      _
    $region9: #{tpu_custom_call.1} parent=1 // pred_fallthru
      _
    // Predicated region
    $region10: #{tpu_custom_call.1} parent=1 // pred_check
      _
    $region11: #{tpu_custom_call.1} parent=1 // pred_check_branch
      %20 = sbr.rel (0) target = $region13
    $region12: #{tpu_custom_call.1} parent=1 // pred_region
      _
    $region13: #{tpu_custom_call.1} parent=1 // pred_fallthru
      _
    // Predicated region
    $region14: #{tpu_custom_call.1} parent=1 // pred_check
      _
    $region15: #{tpu_custom_call.1} parent=1 // pred_check_branch
      %22 = sbr.rel (0) target = $region17
    $region16: #{tpu_custom_call.1} parent=1 // pred_region
      _
    $region17: #{tpu_custom_call.1} parent=1 // pred_fallthru
      _
    // Predicated region
    $region18: #{tpu_custom_call.1} parent=1 // pred_check
      _
    $region19: #{tpu_custom_call.1} parent=1 // pred_check_branch
      %24 = sbr.rel (0) target = $region21
    $region20: #{tpu_custom_call.1} parent=1 // pred_region
      _
    $region21: #{tpu_custom_call.1} parent=1 // pred_fallthru
      _
    // Predicated region
    $region22: #{tpu_custom_call.1} parent=1 // pred_check
      _
    $region23: #{tpu_custom_call.1} parent=1 // pred_check_branch
      %26 = sbr.rel (0) target = $region25
    $region24: #{tpu_custom_call.1} parent=1 // pred_region
      _
    $region25: #{tpu_custom_call.1} parent=1 // pred_fallthru
      _
    // Predicated region
    $region26: #{tpu_custom_call.1} parent=1 // pred_check
      _
    $region27: #{tpu_custom_call.1} parent=1 // pred_check_branch
      %28 = sbr.rel (0) target = $region29
    $region28: #{tpu_custom_call.1} parent=1 // pred_region
      _
    $region29: #{tpu_custom_call.1} parent=1 // pred_fallthru
      _
    %v29 = vld [vmem:[%s0] sm:$0xff]
    %v30 = vld [vmem:[%s0 + $0x8] sm:$0xff]
    %v31 = vld [vmem:[%s0 + $0x10] sm:$0xff]
    %v32 = vld [vmem:[%s0 + $0x18] sm:$0xff]
    %v33 = vld [vmem:[%s0 + $0x20] sm:$0xff]
    %v34 = vld [vmem:[%s0 + $0x28] sm:$0xff]
    %v35 = vld [vmem:[%s0 + $0x30] sm:$0xff]
    %v36 = vld [vmem:[%s0 + $0x38] sm:$0xff]
    %v37 = vld [vmem:[%s0 + $0x40] sm:$0xff]
    %v38 = vld [vmem:[%s0 + $0x48] sm:$0xff]
    %v39 = vld [vmem:[%s0 + $0x50] sm:$0xff]
    %v40 = vld [vmem:[%s0 + $0x58] sm:$0xff]
    %v41 = vld [vmem:[%s0 + $0x60] sm:$0xff]
    %v42 = vld [vmem:[%s0 + $0x68] sm:$0xff]
    %v43 = vld [vmem:[%s0 + $0x70] sm:$0xff]
    %v44 = vld [vmem:[%s0 + $0x78] sm:$0xff]
    %v45 = vld [vmem:[%s1] sm:$0xff]
    %v46 = vld [vmem:[%s1 + $0x8] sm:$0xff]
    %v47 = vld [vmem:[%s1 + $0x10] sm:$0xff]
    %v48 = vld [vmem:[%s1 + $0x18] sm:$0xff]
    %v49 = vld [vmem:[%s2] sm:$0xff]
    %v50 = vld [vmem:[%s2 + $0x8] sm:$0xff]
    %v51 = vld [vmem:[%s2 + $0x10] sm:$0xff]
    %v52 = vld [vmem:[%s2 + $0x18] sm:$0xff]
    %54 = vset.pattern.permute.xlu0 0
    %55 = vperm.xlu0 %54, %v49
    %v56 = vpop.permute.xlu0 %55
    %59 = vset.pattern.permute.xlu0 0
    %60 = vperm.xlu0 %59, %v50
    %v61 = vpop.permute.xlu0 %60
    %64 = vset.pattern.permute.xlu0 0
    %65 = vperm.xlu0 %64, %v51
    %v66 = vpop.permute.xlu0 %65
    %69 = vset.pattern.permute.xlu0 0
    %70 = vperm.xlu0 %69, %v52
    %v71 = vpop.permute.xlu0 %70
    %vm73 = vcmask 130048
    %v75 = vsel %vm73, %v45, 0
    %v78 = vsel %vm73, %v46, 0
    %v81 = vsel %vm73, %v47, 0
    %v84 = vsel %vm73, %v48, 0
    %v87 = vsel %vm73, %v29, 0
    %v90 = vsel %vm73, %v30, 0
    %v93 = vsel %vm73, %v31, 0
    %v96 = vsel %vm73, %v32, 0
    %v99 = vsel %vm73, %v33, 0
    %v102 = vsel %vm73, %v34, 0
    %v105 = vsel %vm73, %v35, 0
    %v108 = vsel %vm73, %v36, 0
    %v111 = vsel %vm73, %v37, 0
    %v114 = vsel %vm73, %v38, 0
    %v117 = vsel %vm73, %v39, 0
    %v120 = vsel %vm73, %v40, 0
    %v123 = vsel %vm73, %v41, 0
    %v126 = vsel %vm73, %v42, 0
    %v129 = vsel %vm73, %v43, 0
    %v132 = vsel %vm73, %v44, 0
    %134 = vmatprep.subr.mxu0 0.0
    %135 = vmatpush1.xpose.msra.mxu0 %v87
    %136 = vmatprep.subr.mxu0 0.0
    %137 = vmatpush1.xpose.msra.mxu0 %v90
    %138 = vmatprep.subr.mxu0 0.0
    %139 = vmatpush1.xpose.msra.mxu0 %v93
    %140 = vmatprep.subr.mxu0 0.0
    %141 = vmatpush1.xpose.msra.mxu0 %v96
    %142 = vmatprep.subr.mxu0 0.0
    %143 = vmatpush1.xpose.msra.mxu0 %v99
    %144 = vmatprep.subr.mxu0 0.0
    %145 = vmatpush1.xpose.msra.mxu0 %v102
    %146 = vmatprep.subr.mxu0 0.0
    %147 = vmatpush1.xpose.msra.mxu0 %v105
    %148 = vmatprep.subr.mxu0 0.0
    %149 = vmatpush1.xpose.msra.mxu0 %v108
    %150 = vmatprep.subr.mxu0 0.0
    %151 = vmatpush1.xpose.msra.mxu0 %v111
    %152 = vmatprep.subr.mxu0 0.0
    %153 = vmatpush1.xpose.msra.mxu0 %v114
    %154 = vmatprep.subr.mxu0 0.0
    %155 = vmatpush1.xpose.msra.mxu0 %v117
    %156 = vmatprep.subr.mxu0 0.0
    %157 = vmatpush1.xpose.msra.mxu0 %v120
    %158 = vmatprep.subr.mxu0 0.0
    %159 = vmatpush1.xpose.msra.mxu0 %v123
    %160 = vmatprep.subr.mxu0 0.0
    %161 = vmatpush1.xpose.msra.mxu0 %v126
    %162 = vmatprep.subr.mxu0 0.0
    %163 = vmatpush1.xpose.msra.mxu0 %v129
    %164 = vmatprep.subr.mxu0 0.0
    %165 = vmatpush1.xpose.msra.mxu0 %v132
    %166 = vmatprep.subr.mxu0 0.0
    %167 = vmatpush1.xpose.msra.mxu0 0.0
    %168 = vmatprep.subr.mxu0 0.0
    %169 = vmatpush1.xpose.msra.mxu0 0.0
    %170 = vmatprep.subr.mxu0 0.0
    %171 = vmatpush1.xpose.msra.mxu0 0.0
    %172 = vmatprep.subr.mxu0 0.0
    %173 = vmatpush1.xpose.msra.mxu0 0.0
    %174 = vmatprep.subr.mxu0 0.0
    %175 = vmatpush1.xpose.msra.mxu0 0.0
    %176 = vmatprep.subr.mxu0 0.0
    %177 = vmatpush1.xpose.msra.mxu0 0.0
    %178 = vmatprep.subr.mxu0 0.0
    %179 = vmatpush1.xpose.msra.mxu0 0.0
    %180 = vmatprep.subr.mxu0 0.0
    %181 = vmatpush1.xpose.msra.mxu0 0.0
    %182 = vmatprep.subr.mxu0 0.0
    %183 = vmatpush1.xpose.msra.mxu0 0.0
    %184 = vmatprep.subr.mxu0 0.0
    %185 = vmatpush1.xpose.msra.mxu0 0.0
    %186 = vmatprep.subr.mxu0 0.0
    %187 = vmatpush1.xpose.msra.mxu0 0.0
    %188 = vmatprep.subr.mxu0 0.0
    %189 = vmatpush1.xpose.msra.mxu0 0.0
    %190 = vmatprep.subr.mxu0 0.0
    %191 = vmatpush1.xpose.msra.mxu0 0.0
    %192 = vmatprep.subr.mxu0 0.0
    %193 = vmatpush1.xpose.msra.mxu0 0.0
    %194 = vmatprep.subr.mxu0 0.0
    %195 = vmatpush1.xpose.msra.mxu0 0.0
    %196 = vmatprep.subr.mxu0 0.0
    %197 = vmatpush1.xpose.msra.mxu0 0.0
    %198 = vmatprep.mubr.f32.mxu0 0.0
    %199 = vmatmul.mubr.f32.gmra.mrb[0].mxu0 %v75
    %v200 = vpop.f32.mrb[0].mxu0
    %v201 = vadd.f32 %v56, %v200
    %v202 = vpop.f32.mrb[0].mxu0
    %203 = vmatprep.mubr.f32.mxu0 0.0
    %204 = vmatmul.mubr.f32.gmra.mrb[0].mxu0 %v78
    %v205 = vpop.f32.mrb[0].mxu0
    %v206 = vadd.f32 %v61, %v205
    %v207 = vpop.f32.mrb[0].mxu0
    %208 = vmatprep.mubr.f32.mxu0 0.0
    %209 = vmatmul.mubr.f32.gmra.mrb[0].mxu0 %v81
    %v210 = vpop.f32.mrb[0].mxu0
    %v211 = vadd.f32 %v66, %v210
    %v212 = vpop.f32.mrb[0].mxu0
    %213 = vmatprep.mubr.f32.mxu0 0.0
    %214 = vmatmul.mubr.f32.gmra.mrb[0].mxu0 %v84
    %v215 = vpop.f32.mrb[0].mxu0
    %v216 = vadd.f32 %v71, %v215
    %v217 = vpop.f32.mrb[0].mxu0
    %218 = vdwg.mxu0
    %v219 = vmul.f32 %v201, 0.1
    %v220 = vmul.f32 %v206, 0.1
    %v221 = vmul.f32 %v211, 0.1
    %v222 = vmul.f32 %v216, 0.1
    %v223 = vmax.f32 %v201, %v219
    %v224 = vmax.f32 %v206, %v220
    %v225 = vmax.f32 %v211, %v221
    %v226 = vmax.f32 %v216, %v222
    %v227 = vld [vmem:[%s3] sm:$0xff]
    %v228 = vld [vmem:[%s3 + $0x8] sm:$0xff]
    %v229 = vld [vmem:[%s3 + $0x10] sm:$0xff]
    %v230 = vld [vmem:[%s3 + $0x18] sm:$0xff]
    %v231 = vld [vmem:[%s4] sm:$0xff]
    %v232 = vld [vmem:[%s4 + $0x8] sm:$0xff]
    %v233 = vld [vmem:[%s4 + $0x10] sm:$0xff]
    %v234 = vld [vmem:[%s4 + $0x18] sm:$0xff]
    %236 = vset.pattern.permute.xlu0 0
    %237 = vperm.xlu0 %236, %v231
    %v238 = vpop.permute.xlu0 %237
    %241 = vset.pattern.permute.xlu0 0
    %242 = vperm.xlu0 %241, %v232
    %v243 = vpop.permute.xlu0 %242
    %246 = vset.pattern.permute.xlu0 0
    %247 = vperm.xlu0 %246, %v233
    %v248 = vpop.permute.xlu0 %247
    %251 = vset.pattern.permute.xlu0 0
    %252 = vperm.xlu0 %251, %v234
    %v253 = vpop.permute.xlu0 %252
    %vm255 = vcmask 261120
    %v257 = vsel %vm255, %v227, 0
    %v260 = vsel %vm255, %v228, 0
    %v263 = vsel %vm255, %v229, 0
    %v266 = vsel %vm255, %v230, 0
    %268 = vmatprep.subr.mxu0 0.0
    %269 = vmatpush1.msra.mxu0 %v223
    %270 = vmatprep.subr.mxu0 0.0
    %271 = vmatpush1.msra.mxu0 %v224
    %272 = vmatprep.subr.mxu0 0.0
    %273 = vmatpush1.msra.mxu0 %v225
    %274 = vmatprep.subr.mxu0 0.0
    %275 = vmatpush1.msra.mxu0 %v226
    %276 = vmatprep.subr.mxu0 0.0
    %277 = vmatpush1.msra.mxu0 0.0
    %278 = vmatprep.subr.mxu0 0.0
    %279 = vmatpush1.msra.mxu0 0.0
    %280 = vmatprep.subr.mxu0 0.0
    %281 = vmatpush1.msra.mxu0 0.0
    %282 = vmatprep.subr.mxu0 0.0
    %283 = vmatpush1.msra.mxu0 0.0
    %284 = vmatprep.subr.mxu0 0.0
    %285 = vmatpush1.msra.mxu0 0.0
    %286 = vmatprep.subr.mxu0 0.0
    %287 = vmatpush1.msra.mxu0 0.0
    %288 = vmatprep.subr.mxu0 0.0
    %289 = vmatpush1.msra.mxu0 0.0
    %290 = vmatprep.subr.mxu0 0.0
    %291 = vmatpush1.msra.mxu0 0.0
    %292 = vmatprep.subr.mxu0 0.0
    %293 = vmatpush1.msra.mxu0 0.0
    %294 = vmatprep.subr.mxu0 0.0
    %295 = vmatpush1.msra.mxu0 0.0
    %296 = vmatprep.subr.mxu0 0.0
    %297 = vmatpush1.msra.mxu0 0.0
    %298 = vmatprep.subr.mxu0 0.0
    %299 = vmatpush1.msra.mxu0 0.0
    %300 = vmatprep.subr.mxu0 0.0
    %301 = vmatpush1.msra.mxu0 0.0
    %302 = vmatprep.subr.mxu0 0.0
    %303 = vmatpush1.msra.mxu0 0.0
    %304 = vmatprep.subr.mxu0 0.0
    %305 = vmatpush1.msra.mxu0 0.0
    %306 = vmatprep.subr.mxu0 0.0
    %307 = vmatpush1.msra.mxu0 0.0
    %308 = vmatprep.subr.mxu0 0.0
    %309 = vmatpush1.msra.mxu0 0.0
    %310 = vmatprep.subr.mxu0 0.0
    %311 = vmatpush1.msra.mxu0 0.0
    %312 = vmatprep.subr.mxu0 0.0
    %313 = vmatpush1.msra.mxu0 0.0
    %314 = vmatprep.subr.mxu0 0.0
    %315 = vmatpush1.msra.mxu0 0.0
    %316 = vmatprep.subr.mxu0 0.0
    %317 = vmatpush1.msra.mxu0 0.0
    %318 = vmatprep.subr.mxu0 0.0
    %319 = vmatpush1.msra.mxu0 0.0
    %320 = vmatprep.subr.mxu0 0.0
    %321 = vmatpush1.msra.mxu0 0.0
    %322 = vmatprep.subr.mxu0 0.0
    %323 = vmatpush1.msra.mxu0 0.0
    %324 = vmatprep.subr.mxu0 0.0
    %325 = vmatpush1.msra.mxu0 0.0
    %326 = vmatprep.subr.mxu0 0.0
    %327 = vmatpush1.msra.mxu0 0.0
    %328 = vmatprep.subr.mxu0 0.0
    %329 = vmatpush1.msra.mxu0 0.0
    %330 = vmatprep.subr.mxu0 0.0
    %331 = vmatpush1.msra.mxu0 0.0
    %332 = vmatprep.mubr.f32.mxu0 0.0
    %333 = vmatmul.mubr.f32.gmra.mrb[0].mxu0 %v257
    %v334 = vpop.f32.mrb[0].mxu0
    %v335 = vadd.f32 %v238, %v334
    %v336 = vpop.f32.mrb[0].mxu0
    %337 = vmatprep.mubr.f32.mxu0 0.0
    %338 = vmatmul.mubr.f32.gmra.mrb[0].mxu0 %v260
    %v339 = vpop.f32.mrb[0].mxu0
    %v340 = vadd.f32 %v243, %v339
    %v341 = vpop.f32.mrb[0].mxu0
    %342 = vmatprep.mubr.f32.mxu0 0.0
    %343 = vmatmul.mubr.f32.gmra.mrb[0].mxu0 %v263
    %v344 = vpop.f32.mrb[0].mxu0
    %v345 = vadd.f32 %v248, %v344
    %v346 = vpop.f32.mrb[0].mxu0
    %347 = vmatprep.mubr.f32.mxu0 0.0
    %348 = vmatmul.mubr.f32.gmra.mrb[0].mxu0 %v266
    %v349 = vpop.f32.mrb[0].mxu0
    %v350 = vadd.f32 %v253, %v349
    %v351 = vpop.f32.mrb[0].mxu0
    %352 = vdwg.mxu0
    %v353 = vmul.f32 %v335, 0.1
    %v354 = vmul.f32 %v340, 0.1
    %v355 = vmul.f32 %v345, 0.1
    %v356 = vmul.f32 %v350, 0.1
    %v357 = vmax.f32 %v335, %v353
    %v358 = vmax.f32 %v340, %v354
    %v359 = vmax.f32 %v345, %v355
    %v360 = vmax.f32 %v350, %v356
    %v361 = vld [vmem:[%s5] sm:$0x1]
    %v362 = vld [vmem:[#allocation2] sm:$0x1]
    %364 = vset.pattern.permute.xlu0 0
    %365 = vperm.xlu0 %364, %v362
    %v366 = vpop.permute.xlu0 %365
    %v368 = vlaneseq
    %v369 = vshrl.u32 %v368, 7
    %v370 = vsub.s32 0, %v369
    %v371 = vrot.slane %v366, %v370
    %v373 = vsel %vm255, %v361, 0
    %375 = vmatprep.subr.mxu0 0.0
    %376 = vmatpush1.msra.mxu0 %v357
    %377 = vmatprep.subr.mxu0 0.0
    %378 = vmatpush1.msra.mxu0 %v358
    %379 = vmatprep.subr.mxu0 0.0
    %380 = vmatpush1.msra.mxu0 %v359
    %381 = vmatprep.subr.mxu0 0.0
    %382 = vmatpush1.msra.mxu0 %v360
    %383 = vmatprep.subr.mxu0 0.0
    %384 = vmatpush1.msra.mxu0 0.0
    %385 = vmatprep.subr.mxu0 0.0
    %386 = vmatpush1.msra.mxu0 0.0
    %387 = vmatprep.subr.mxu0 0.0
    %388 = vmatpush1.msra.mxu0 0.0
    %389 = vmatprep.subr.mxu0 0.0
    %390 = vmatpush1.msra.mxu0 0.0
    %391 = vmatprep.subr.mxu0 0.0
    %392 = vmatpush1.msra.mxu0 0.0
    %393 = vmatprep.subr.mxu0 0.0
    %394 = vmatpush1.msra.mxu0 0.0
    %395 = vmatprep.subr.mxu0 0.0
    %396 = vmatpush1.msra.mxu0 0.0
    %397 = vmatprep.subr.mxu0 0.0
    %398 = vmatpush1.msra.mxu0 0.0
    %399 = vmatprep.subr.mxu0 0.0
    %400 = vmatpush1.msra.mxu0 0.0
    %401 = vmatprep.subr.mxu0 0.0
    %402 = vmatpush1.msra.mxu0 0.0
    %403 = vmatprep.subr.mxu0 0.0
    %404 = vmatpush1.msra.mxu0 0.0
    %405 = vmatprep.subr.mxu0 0.0
    %406 = vmatpush1.msra.mxu0 0.0
    %407 = vmatprep.subr.mxu0 0.0
    %408 = vmatpush1.msra.mxu0 0.0
    %409 = vmatprep.subr.mxu0 0.0
    %410 = vmatpush1.msra.mxu0 0.0
    %411 = vmatprep.subr.mxu0 0.0
    %412 = vmatpush1.msra.mxu0 0.0
    %413 = vmatprep.subr.mxu0 0.0
    %414 = vmatpush1.msra.mxu0 0.0
    %415 = vmatprep.subr.mxu0 0.0
    %416 = vmatpush1.msra.mxu0 0.0
    %417 = vmatprep.subr.mxu0 0.0
    %418 = vmatpush1.msra.mxu0 0.0
    %419 = vmatprep.subr.mxu0 0.0
    %420 = vmatpush1.msra.mxu0 0.0
    %421 = vmatprep.subr.mxu0 0.0
    %422 = vmatpush1.msra.mxu0 0.0
    %423 = vmatprep.subr.mxu0 0.0
    %424 = vmatpush1.msra.mxu0 0.0
    %425 = vmatprep.subr.mxu0 0.0
    %426 = vmatpush1.msra.mxu0 0.0
    %427 = vmatprep.subr.mxu0 0.0
    %428 = vmatpush1.msra.mxu0 0.0
    %429 = vmatprep.subr.mxu0 0.0
    %430 = vmatpush1.msra.mxu0 0.0
    %431 = vmatprep.subr.mxu0 0.0
    %432 = vmatpush1.msra.mxu0 0.0
    %433 = vmatprep.subr.mxu0 0.0
    %434 = vmatpush1.msra.mxu0 0.0
    %435 = vmatprep.subr.mxu0 0.0
    %436 = vmatpush1.msra.mxu0 0.0
    %437 = vmatprep.subr.mxu0 0.0
    %438 = vmatpush1.msra.mxu0 0.0
    %439 = vmatprep.mubr.f32.mxu0 0.0
    %440 = vmatmul.mubr.f32.gmra.mrb[0].mxu0 %v373
    %v441 = vpop.f32.mrb[0].mxu0
    %v442 = vadd.f32 %v371, %v441
    %v443 = vpop.f32.mrb[0].mxu0
    %444 = vdwg.mxu0
    %445 = vst [vmem:[#allocation3] sm:$0x1] %v442
    // Predicated region
    $region30: #{tpu_custom_call.1} parent=1 // pred_check
      _
    $region31: #{tpu_custom_call.1} parent=1 // pred_check_branch
      %447 = sbr.rel (0) target = $region33
    $region32: #{tpu_custom_call.1} parent=1 // pred_region
      %s449 = ssub.s32 16, 16
      %450 = vsyncadd [#allocation4], %s449
      %s452 = sshll.u32 [#allocation3], 4
      %s453 = int_to_ptr.vmem [resolvable:$true] %s452
      %455 = dma.vmem_to_hbm [thread:$0]  %s453, 16, %s7, [#allocation4]
    $region33: #{tpu_custom_call.1} parent=1 // pred_fallthru
      _
    // Predicated region
    $region34: #{tpu_custom_call.1} parent=1 // pred_check
      _
    $region35: #{tpu_custom_call.1} parent=1 // pred_check_branch
      %457 = sbr.rel (0) target = $region37
    $region36: #{tpu_custom_call.1} parent=1 // pred_region
      %458 = dma.done [#allocation4], 16
    $region37: #{tpu_custom_call.1} parent=1 // pred_fallthru
      _
    %459 = vsyncpa [#allocation4], 1

</llo_original>
